<compile_context>
chip_gen: v5e
topology: v5e:2x2
jax: 0.10.0
libtpu: 0.0.40
codegen_flags: <defaults>
</compile_context>

<pallas_src>
import math

import jax
import jax.numpy as jnp
from jax import lax
from jax.experimental import pallas as pl
from jax.experimental.pallas import tpu as pltpu

# Scoped-VMEM request: safe on v5e/v6e (128 MiB physical) and exactly the
# default half of v7x's 64 MiB physical.
_VMEM_LIMIT = 32 * 1024 * 1024


def _choose_time_chunk(T, target):
    """Largest chunk <= target that divides T (keeps blocks exact, no T padding)."""
    tc = max(1, min(T, target))
    while T % tc:
        tc -= 1
    return tc


# ----------------------------------------------------------------------------
# Kernel 1: fused input projection  gx = x @ Wi + (b_ih + b_hh)
# (also reused for the fc head: logits = h_last @ W_fc + b_fc)
# ----------------------------------------------------------------------------
def input_proj_kernel(x_ref, wi_ref, b_ref, gx_ref):
    acc = jnp.dot(x_ref[...], wi_ref[...],
                  preferred_element_type=jnp.float32) + b_ref[...]
    gx_ref[...] = acc.astype(gx_ref.dtype)


def input_proj(x_rows, wi, b, *, out_dtype=jnp.float32, row_tile=256):
    """x_rows: (M, D), wi: (D, G), b: (1, G) -> (M, G) in out_dtype."""
    M, D = x_rows.shape
    G = wi.shape[-1]
    tm = min(M, row_tile)
    # TODO(synk): for very large G (=4H), also tile G with a second parallel
    # grid axis so megacore can shard the projection on v7x.
    return pl.pallas_call(
        input_proj_kernel,
        out_shape=jax.ShapeDtypeStruct((M, G), out_dtype),
        grid_spec=pltpu.PrefetchScalarGridSpec(
            num_scalar_prefetch=0,
            grid=(pl.cdiv(M, tm),),
            in_specs=[
                pl.BlockSpec((tm, D), lambda i: (i, 0)),
                pl.BlockSpec((D, G), lambda i: (0, 0)),   # resident weights
                pl.BlockSpec((1, G), lambda i: (0, 0)),   # resident bias
            ],
            out_specs=pl.BlockSpec((tm, G), lambda i: (i, 0)),
        ),
        compiler_params=pltpu.CompilerParams(
            dimension_semantics=("parallel",),
            vmem_limit_bytes=_VMEM_LIMIT),
    )(x_rows, wi, b)


# ----------------------------------------------------------------------------
# LSTM cell math (shared by the two recurrence kernels)
# gates: (B, 4H) f32, c: (B, H) f32, g_mask: (B, 4H) bool (True on g columns)
# ----------------------------------------------------------------------------
def _lstm_cell(gates, c, H, g_mask):
    # One tanh + one sigmoid pass over the full gates tile (EUP slot), select
    # per-lane, then slice.  Elementwise-identical to per-gate activations.
    act = jnp.where(g_mask, jnp.tanh(gates), jax.nn.sigmoid(gates))
    i = act[:, 0 * H:1 * H]
    f = act[:, 1 * H:2 * H]
    g = act[:, 2 * H:3 * H]
    o = act[:, 3 * H:4 * H]
    c_new = f * c + i * g
    h_new = o * jnp.tanh(c_new)
    return h_new, c_new


# ----------------------------------------------------------------------------
# Kernel 2: recurrence over T, chunked (grid over chunks, unrolled inner loop),
# emits the full (T, B, H) hidden sequence for the next layer.
# ----------------------------------------------------------------------------
def lstm_seq_kernel(gx_ref, wh_ref, out_ref, h_ref, c_ref):
    c_idx = pl.program_id(0)

    @pl.when(c_idx == 0)
    def _():
        h_ref[...] = jnp.zeros_like(h_ref)
        c_ref[...] = jnp.zeros_like(c_ref)

    Tc, B, G = gx_ref.shape
    H = h_ref.shape[-1]
    wh = wh_ref[...]
    # Hoisted out of the timestep loop (JAX does not CSE broadcast_in_dim).
    lane = lax.broadcasted_iota(jnp.int32, (B, G), 1)
    g_mask = (lane >= 2 * H) & (lane < 3 * H)

    def step(t, carry):
        h, c = carry
        gates = gx_ref[t].astype(jnp.float32) + jnp.dot(
            h.astype(wh.dtype), wh, preferred_element_type=jnp.float32)
        h_new, c_new = _lstm_cell(gates, c, H, g_mask)
        out_ref[t] = h_new.astype(out_ref.dtype)
        return (h_new, c_new)

    h, c = lax.fori_loop(0, Tc, step, (h_ref[...], c_ref[...]), unroll=True)
    h_ref[...] = h
    c_ref[...] = c


def lstm_layer_seq(gx, wh, time_chunk, out_dtype):
    """gx: (T, B, 4H) time-major pre-projected input, wh: (H, 4H) -> (T, B, H)."""
    T, B, G = gx.shape
    H = wh.shape[0]
    n_chunks = T // time_chunk
    return pl.pallas_call(
        lstm_seq_kernel,
        out_shape=jax.ShapeDtypeStruct((T, B, H), out_dtype),
        grid_spec=pltpu.PrefetchScalarGridSpec(
            num_scalar_prefetch=0,
            grid=(n_chunks,),
            in_specs=[
                pl.BlockSpec((time_chunk, B, G), lambda c: (c, 0, 0)),
                pl.BlockSpec((H, G), lambda c: (0, 0)),   # resident weights
            ],
            out_specs=pl.BlockSpec((time_chunk, B, H), lambda c: (c, 0, 0)),
            scratch_shapes=[pltpu.VMEM((B, H), jnp.float32),   # h carry
                            pltpu.VMEM((B, H), jnp.float32)],  # c carry
        ),
        compiler_params=pltpu.CompilerParams(
            dimension_semantics=("arbitrary",),   # serial recurrence
            vmem_limit_bytes=_VMEM_LIMIT),
    )(gx, wh)


# ----------------------------------------------------------------------------
# Kernel 3: last layer — same chunked recurrence but only the final hidden
# state is emitted (the fc head is hoisted out as a separate tiny matmul).
# ----------------------------------------------------------------------------
def lstm_last_kernel(gx_ref, wh_ref, h_last_ref, h_ref, c_ref):
    c_idx = pl.program_id(0)

    @pl.when(c_idx == 0)
    def _():
        h_ref[...] = jnp.zeros_like(h_ref)
        c_ref[...] = jnp.zeros_like(c_ref)

    Tc, B, G = gx_ref.shape
    H = h_ref.shape[-1]
    wh = wh_ref[...]
    lane = lax.broadcasted_iota(jnp.int32, (B, G), 1)
    g_mask = (lane >= 2 * H) & (lane < 3 * H)

    def step(t, carry):
        h, c = carry
        gates = gx_ref[t].astype(jnp.float32) + jnp.dot(
            h.astype(wh.dtype), wh, preferred_element_type=jnp.float32)
        return _lstm_cell(gates, c, H, g_mask)

    h, c = lax.fori_loop(0, Tc, step, (h_ref[...], c_ref[...]), unroll=True)
    h_ref[...] = h
    c_ref[...] = c

    @pl.when(c_idx == pl.num_programs(0) - 1)
    def _():
        h_last_ref[...] = h


def lstm_last_layer(gx, wh, time_chunk):
    """Returns only h_T (B, H) in f32; unused (T-1) timesteps are never stored."""
    T, B, G = gx.shape
    H = wh.shape[0]
    n_chunks = T // time_chunk
    return pl.pallas_call(
        lstm_last_kernel,
        out_shape=jax.ShapeDtypeStruct((B, H), jnp.float32),
        grid_spec=pltpu.PrefetchScalarGridSpec(
            num_scalar_prefetch=0,
            grid=(n_chunks,),
            in_specs=[
                pl.BlockSpec((time_chunk, B, G), lambda c: (c, 0, 0)),
                pl.BlockSpec((H, G), lambda c: (0, 0)),   # resident weights
            ],
            out_specs=pl.BlockSpec((B, H), lambda c: (0, 0)),  # written once
            scratch_shapes=[pltpu.VMEM((B, H), jnp.float32),
                            pltpu.VMEM((B, H), jnp.float32)],
        ),
        compiler_params=pltpu.CompilerParams(
            dimension_semantics=("arbitrary",),
            vmem_limit_bytes=_VMEM_LIMIT),
    )(gx, wh)


# ----------------------------------------------------------------------------
# Forward wrapper — matches LSTM.forward of the PyTorch module
# ----------------------------------------------------------------------------
def lstm_forward(x, params, sequence_length, input_size, *,
                 compute_dtype=jnp.float32, time_chunk=32):
    x = x.reshape(-1, sequence_length, input_size).astype(jnp.float32)  # (B, T, D)
    B = x.shape[0]

    # Pad batch to a full sublane multiple so gate/h/c tiles are unmasked.
    sub = 16 if compute_dtype == jnp.bfloat16 else 8
    Bp = ((B + sub - 1) // sub) * sub
    if Bp != B:
        x = jnp.pad(x, ((0, Bp - B), (0, 0), (0, 0)))

    h_seq = jnp.transpose(x, (1, 0, 2)).astype(compute_dtype)  # (T, Bp, D) time-major

    layers = params["layers"]
    w_fc, b_fc = params["fc"]
    n_layers = len(layers)
    tc = _choose_time_chunk(sequence_length, time_chunk)

    h_last = None
    for l, (wi, wh, b) in enumerate(layers):
        T, Bn, D = h_seq.shape
        G = wi.shape[-1]
        wi_c = wi.astype(compute_dtype)
        wh_c = wh.astype(compute_dtype)
        gx = input_proj(h_seq.reshape(T * Bn, D), wi_c, b,
                        out_dtype=compute_dtype).reshape(T, Bn, G)
        if l == n_layers - 1:
            h_last = lstm_last_layer(gx, wh_c, tc)                    # (Bp, H) f32
        else:
            h_seq = lstm_layer_seq(gx, wh_c, tc, compute_dtype)       # (T, Bp, H)

    # fc head (hoisted out of the recurrence): one tiny (Bp,H)@(H,C) matmul.
    logits = input_proj(h_last, w_fc, b_fc, out_dtype=jnp.float32)    # (Bp, C)
    return logits[:B]


# ----------------------------------------------------------------------------
# Deterministic parameter init (PyTorch nn.LSTM / nn.Linear shapes, U(-1/sqrt(H)))
# Gate order [i, f, g, o]; weights pre-transposed for x @ W; biases pre-fused.
# ----------------------------------------------------------------------------
def init_params(key, input_size, hidden_size, num_layers, num_classes):
    H = hidden_size
    k = 1.0 / math.sqrt(H)
    layers = []
    for layer in range(num_layers):
        d_in = input_size if layer == 0 else H
        key, k1, k2, k3, k4 = jax.random.split(key, 5)
        w_ih = jax.random.uniform(k1, (4 * H, d_in), jnp.float32, -k, k)
        w_hh = jax.random.uniform(k2, (4 * H, H), jnp.float32, -k, k)
        b_ih = jax.random.uniform(k3, (4 * H,), jnp.float32, -k, k)
        b_hh = jax.random.uniform(k4, (4 * H,), jnp.float32, -k, k)
        wi = w_ih.T                                  # (d_in, 4H)
        wh = w_hh.T                                  # (H, 4H)
        b = (b_ih + b_hh).reshape(1, 4 * H)          # fully fusable for LSTM
        layers.append((wi, wh, b))
    key, kf1, kf2 = jax.random.split(key, 3)
    w_fc = jax.random.uniform(kf1, (num_classes, H), jnp.float32, -k, k)
    b_fc = jax.random.uniform(kf2, (num_classes,), jnp.float32, -k, k)
    return {"layers": layers, "fc": (w_fc.T, b_fc.reshape(1, -1))}


# ----------------------------------------------------------------------------
# Pure-JAX reference (correctness check)
# ----------------------------------------------------------------------------
def _ref_lstm_layer(x_tbd, wi, wh, b):
    H = wh.shape[0]
    B = x_tbd.shape[1]
    gx = x_tbd @ wi + b                              # (T, B, 4H)

    def step(carry, g_t):
        h, c = carry
        gates = g_t + h @ wh
        i = jax.nn.sigmoid(gates[:, 0 * H:1 * H])
        f = jax.nn.sigmoid(gates[:, 1 * H:2 * H])
        g = jnp.tanh(gates[:, 2 * H:3 * H])
        o = jax.nn.sigmoid(gates[:, 3 * H:4 * H])
        c_new = f * c + i * g
        h_new = o * jnp.tanh(c_new)
        return (h_new, c_new), h_new

    init = (jnp.zeros((B, H), jnp.float32), jnp.zeros((B, H), jnp.float32))
    _, out = lax.scan(step, init, gx)
    return out


def _ref_forward(x, params, sequence_length, input_size):
    x = x.reshape(-1, sequence_length, input_size).astype(jnp.float32)
    h_seq = jnp.transpose(x, (1, 0, 2))
    for (wi, wh, b) in params["layers"]:
        h_seq = _ref_lstm_layer(h_seq, wi, wh, b)
    last = h_seq[-1]                                 # (B, H)
    w_fc, b_fc = params["fc"]
    return last @ w_fc + b_fc


# ----------------------------------------------------------------------------
if __name__ == "__main__":
    sequence_length = 8
    input_size = 16
    hidden_size = 32
    num_layers = 2
    num_classes = 10
    batch = 2

    key = jax.random.PRNGKey(0)
    key, kx, kp = jax.random.split(key, 3)
    x = jax.random.normal(kx, (batch, sequence_length, input_size), jnp.float32)
    params = init_params(kp, input_size, hidden_size, num_layers, num_classes)

    # f32 path: tight numerical check against the pure-JAX reference.
    out = lstm_forward(x, params, sequence_length, input_size)
    out = jax.block_until_ready(out)
    assert out.shape == (batch, num_classes), out.shape

    ref = _ref_forward(x, params, sequence_length, input_size)
    err = jnp.max(jnp.abs(out - ref))
    assert jnp.allclose(out, ref, rtol=1e-4, atol=1e-4), f"max abs err {err}"

    # bf16 MXU path (smoke test; looser numerics by construction).
    out_bf16 = lstm_forward(x, params, sequence_length, input_size,
                            compute_dtype=jnp.bfloat16)
    out_bf16 = jax.block_until_ready(out_bf16)
    assert out_bf16.shape == (batch, num_classes), out_bf16.shape
    assert bool(jnp.all(jnp.isfinite(out_bf16)))

    print("KERNEL_OK")
</pallas_src>

<mosaic_0001>
module attributes {stable_mosaic.version = 11 : i64} {
  func.func @input_proj_kernel(%arg0: i32, %arg1: memref<64x16xf32, #tpu.memory_space<vmem>>, %arg2: memref<16x128xf32, #tpu.memory_space<vmem>>, %arg3: memref<1x128xf32, #tpu.memory_space<vmem>>, %arg4: memref<64x128xf32, #tpu.memory_space<vmem>>) attributes {dimension_semantics = [#tpu.dimension_semantics<parallel>], iteration_bounds = array<i64: 1>, scalar_prefetch = 0 : i64, scratch_operands = 0 : i64, tpu.core_type = #tpu.core_type<tc>, window_params = [{transform_indices = @transform_0, window_bounds = array<i64: 64, 16>}, {pipeline_mode = #tpu.pipeline_mode<synchronous>, transform_indices = @transform_1, window_bounds = array<i64: 16, 128>}, {pipeline_mode = #tpu.pipeline_mode<synchronous>, transform_indices = @transform_2, window_bounds = array<i64: 1, 128>}, {transform_indices = @transform_3, window_bounds = array<i64: 64, 128>}]} {
    %c0 = arith.constant 0 : index
    %c0_0 = arith.constant 0 : index
    %0 = vector.load %arg1[%c0, %c0_0] : memref<64x16xf32, #tpu.memory_space<vmem>>, vector<64x16xf32>
    %c0_1 = arith.constant 0 : index
    %c0_2 = arith.constant 0 : index
    %1 = vector.load %arg2[%c0_1, %c0_2] : memref<16x128xf32, #tpu.memory_space<vmem>>, vector<16x128xf32>
    %cst = arith.constant dense<0.000000e+00> : vector<64x128xf32>
    %2 = tpu.matmul %0, %1, %cst {dimension_numbers = #tpu.dot_dimension_numbers<[1], [0], [0], [1], [0, 0, 1, 1], [], []>} : vector<64x16xf32>, vector<16x128xf32>, vector<64x128xf32> -> vector<64x128xf32>
    %c0_3 = arith.constant 0 : index
    %c0_4 = arith.constant 0 : index
    %3 = vector.load %arg3[%c0_3, %c0_4] : memref<1x128xf32, #tpu.memory_space<vmem>>, vector<1x128xf32>
    %4 = vector.broadcast %3 : vector<1x128xf32> to vector<64x128xf32>
    %5 = arith.addf %2, %4 : vector<64x128xf32>
    %c0_5 = arith.constant 0 : index
    %c0_6 = arith.constant 0 : index
    %6 = vector.load %arg4[%c0_5, %c0_6] : memref<64x128xf32, #tpu.memory_space<vmem>>, vector<64x128xf32>
    tpu.vector_store %arg4[%c0_5, %c0_6], %5 {strides = array<i32>} : memref<64x128xf32, #tpu.memory_space<vmem>>, vector<64x128xf32>,
    return
  }
  func.func @transform_0(%arg0: i32) -> (i32, i32) {
    %c0_i32 = arith.constant 0 : i32
    %c0_i32_0 = arith.constant 0 : i32
    return %arg0, %c0_i32 : i32, i32
  }
  func.func @transform_1(%arg0: i32) -> (i32, i32) {
    %c0_i32 = arith.constant 0 : i32
    %c0_i32_0 = arith.constant 0 : i32
    %c0_i32_1 = arith.constant 0 : i32
    return %c0_i32, %c0_i32_0 : i32, i32
  }
  func.func @transform_2(%arg0: i32) -> (i32, i32) {
    %c0_i32 = arith.constant 0 : i32
    %c0_i32_0 = arith.constant 0 : i32
    %c0_i32_1 = arith.constant 0 : i32
    return %c0_i32, %c0_i32_0 : i32, i32
  }
  func.func @transform_3(%arg0: i32) -> (i32, i32) {
    %c0_i32 = arith.constant 0 : i32
    %c0_i32_0 = arith.constant 0 : i32
    return %arg0, %c0_i32 : i32, i32
  }
}

</mosaic_0001>

<llo_original>
// kernel: tpu_custom_call.1
$region0: #{tpu_custom_call.1}
  #allocation0 [shape = 'u32[]', space=smem, size = 0x4, offset = 0x4, fixed_abs, tag = 'smem constant byte address 0x4 - core index']
  #allocation1 [shape = 'u32[72,128]{1,0:T(1,128)}', space=vmem, size = 0x9000, scoped, tag = 'internal scratch']
  %s0 = inlined_call_operand.vmem [shape: f32[64,16], index: 0, kind: input, shape index: {}]
  %s1 = inlined_call_operand.vmem [shape: f32[16,128], index: 1, kind: input, shape index: {}]
  %s2 = inlined_call_operand.vmem [shape: f32[1,128], index: 2, kind: input, shape index: {}]
  %s3 = inlined_call_operand.hbm [shape: f32[64,128], index: 3, kind: output, shape index: {}]
  %s4 = sld [smem:[#allocation0]]
  $region22: #{tpu_custom_call.1} parent=0
    _
  %s6 = ssub.s32 1, %s4
  %s7 = scalar_select 0, %s6, %s4
  $region1: #{tpu_custom_call.1} parent=0
    #allocation2 [shape = 'u8[32768]{0}', space=vmem, size = 0x8000, scoped, tag = 'output window, operand 0, single buffered']
    #allocation3 [shape = 's32[1]{0}', space=sflag, size = 0x4, scoped, tag = 'scoped memory for tpu_custom_call.1']
    %8 = vsyncpa [#allocation3], 0
    // Predicated region
    $region2: #{tpu_custom_call.1} parent=1 // pred_check
      _
    $region3: #{tpu_custom_call.1} parent=1 // pred_check_branch
      %10 = sbr.rel (0) target = $region5
    $region4: #{tpu_custom_call.1} parent=1 // pred_region
      _
    $region5: #{tpu_custom_call.1} parent=1 // pred_fallthru
      _
    // Predicated region
    $region6: #{tpu_custom_call.1} parent=1 // pred_check
      _
    $region7: #{tpu_custom_call.1} parent=1 // pred_check_branch
      %12 = sbr.rel (0) target = $region9
    $region8: #{tpu_custom_call.1} parent=1 // pred_region
      _
    $region9: #{tpu_custom_call.1} parent=1 // pred_fallthru
      _
    // Predicated region
    $region10: #{tpu_custom_call.1} parent=1 // pred_check
      _
    $region11: #{tpu_custom_call.1} parent=1 // pred_check_branch
      %14 = sbr.rel (0) target = $region13
    $region12: #{tpu_custom_call.1} parent=1 // pred_region
      _
    $region13: #{tpu_custom_call.1} parent=1 // pred_fallthru
      _
    %v15 = vld [vmem:[%s0] sm:$0xff]
    %v16 = vld [vmem:[%s0 + $0x8] sm:$0xff]
    %v17 = vld [vmem:[%s0 + $0x10] sm:$0xff]
    %v18 = vld [vmem:[%s0 + $0x18] sm:$0xff]
    %v19 = vld [vmem:[%s0 + $0x20] sm:$0xff]
    %v20 = vld [vmem:[%s0 + $0x28] sm:$0xff]
    %v21 = vld [vmem:[%s0 + $0x30] sm:$0xff]
    %v22 = vld [vmem:[%s0 + $0x38] sm:$0xff]
    %v23 = vld [vmem:[%s1] sm:$0xff]
    %v24 = vld [vmem:[%s1 + $0x8] sm:$0xff]
    %v25 = vld [vmem:[%s2] sm:$0x1]
    %v27 = vperm.slane %v25, 0
    %vm29 = vcmask 130048
    %v31 = vsel %vm29, %v15, 0
    %v34 = vsel %vm29, %v16, 0
    %v37 = vsel %vm29, %v17, 0
    %v40 = vsel %vm29, %v18, 0
    %v43 = vsel %vm29, %v19, 0
    %v46 = vsel %vm29, %v20, 0
    %v49 = vsel %vm29, %v21, 0
    %v52 = vsel %vm29, %v22, 0
    %54 = vmatpush.msra.mxu0 0.0
    %55 = vmatpush.msra.mxu0 0.0
    %56 = vmatpush.msra.mxu0 0.0
    %57 = vmatpush.msra.mxu0 0.0
    %58 = vmatpush.msra.mxu0 0.0
    %59 = vmatpush.msra.mxu0 0.0
    %60 = vmatpush.msra.mxu0 0.0
    %61 = vmatpush.msra.mxu0 0.0
    %62 = vmatpush.msra.mxu0 0.0
    %63 = vmatpush.msra.mxu0 0.0
    %64 = vmatpush.msra.mxu0 0.0
    %65 = vmatpush.msra.mxu0 0.0
    %66 = vmatpush.msra.mxu0 0.0
    %67 = vmatpush.msra.mxu0 0.0
    %68 = vmatpush.msra.mxu0 %v24
    %69 = vmatpush.msra.mxu0 %v23
    %70 = vmatmul.f32.gmra.mxu0 %v31
    %v71 = vpop.f32.mrf.mxu0
    %v72 = vadd.f32 %v27, %v71
    %73 = vmatmul.f32.gmra.mxu0 %v34
    %v74 = vpop.f32.mrf.mxu0
    %v75 = vadd.f32 %v27, %v74
    %76 = vmatmul.f32.gmra.mxu0 %v37
    %v77 = vpop.f32.mrf.mxu0
    %v78 = vadd.f32 %v27, %v77
    %79 = vmatmul.f32.gmra.mxu0 %v40
    %v80 = vpop.f32.mrf.mxu0
    %v81 = vadd.f32 %v27, %v80
    %82 = vmatmul.f32.gmra.mxu0 %v43
    %v83 = vpop.f32.mrf.mxu0
    %v84 = vadd.f32 %v27, %v83
    %85 = vmatmul.f32.gmra.mxu0 %v46
    %v86 = vpop.f32.mrf.mxu0
    %v87 = vadd.f32 %v27, %v86
    %88 = vmatmul.f32.gmra.mxu0 %v49
    %v89 = vpop.f32.mrf.mxu0
    %v90 = vadd.f32 %v27, %v89
    %91 = vmatmul.f32.gmra.mxu0 %v52
    %v92 = vpop.f32.mrf.mxu0
    %v93 = vadd.f32 %v27, %v92
    %94 = vdwg.mxu0
    %95 = vst [vmem:[#allocation2] sm:$0xff] %v72
    %96 = vst [vmem:[#allocation2 + $0x8] sm:$0xff] %v75
    %97 = vst [vmem:[#allocation2 + $0x10] sm:$0xff] %v78
    %98 = vst [vmem:[#allocation2 + $0x18] sm:$0xff] %v81
    %99 = vst [vmem:[#allocation2 + $0x20] sm:$0xff] %v84
    %100 = vst [vmem:[#allocation2 + $0x28] sm:$0xff] %v87
    %101 = vst [vmem:[#allocation2 + $0x30] sm:$0xff] %v90
    %102 = vst [vmem:[#allocation2 + $0x38] sm:$0xff] %v93
    // Predicated region
    $region14: #{tpu_custom_call.1} parent=1 // pred_check
      _
    $region15: #{tpu_custom_call.1} parent=1 // pred_check_branch
      %104 = sbr.rel (0) target = $region17
    $region16: #{tpu_custom_call.1} parent=1 // pred_region
      %106 = vsyncadd [#allocation3], 0
      %s107 = sshll.u32 [#allocation2], 4
      %s108 = int_to_ptr.vmem [resolvable:$true] %s107
      %s109 = sshll.u32 %s3, 4
      %s110 = int_to_ptr.hbm [resolvable:$true] %s109
      %115 = dma.vmem_to_hbm [thread:$0]  %s108, 1024, %s110, [#allocation3], 128, 128, 8
    $region17: #{tpu_custom_call.1} parent=1 // pred_fallthru
      _
    // Predicated region
    $region18: #{tpu_custom_call.1} parent=1 // pred_check
      _
    $region19: #{tpu_custom_call.1} parent=1 // pred_check_branch
      %117 = sbr.rel (0) target = $region21
    $region20: #{tpu_custom_call.1} parent=1 // pred_region
      %119 = dma.done [#allocation3], 1024
    $region21: #{tpu_custom_call.1} parent=1 // pred_fallthru
      _
    %120 = vsyncpa [#allocation3], 1

</llo_original>
